<compile_context>
chip_gen: v7x
topology: tpu7x:2x2x1
jax: 0.10.0
libtpu: 0.0.40
codegen_flags: <defaults>
</compile_context>

<pallas_src>
import math
import functools

import jax
import jax.numpy as jnp
from jax.experimental import pallas as pl
from jax.experimental.pallas import tpu as pltpu


# --------------------------------------------------------------------------- #
# Pallas kernel: out[n, b, s] = x[n, b, s] * gates[b]
# gates arrive as a (1, B, 1) block and broadcast over the leading (N-tile)
# and lane (H*W-tile) axes — a pure VPU broadcast-multiply (no MXU).
# --------------------------------------------------------------------------- #
def _gate_scale_kernel(g_ref, x_ref, o_ref):
    o_ref[...] = x_ref[...] * g_ref[...]


_MAX_TILE_HW = 2048                 # lanes per block (multiple of 128)
_TARGET_BLOCK_BYTES = 2 * 1024 * 1024   # keep blocks small enough for v7x VMEM


def _choose_tiles(n, b, hw, itemsize):
    """Pick (tile_n, tile_hw) that are lane-dense and ~<= 2 MiB per block."""
    if hw <= _MAX_TILE_HW:
        tile_hw = hw                # full-extent last dim is always legal
    else:
        tile_hw = _MAX_TILE_HW      # multiple of 128 -> unmasked vst
    tile_n = max(1, min(n, _TARGET_BLOCK_BYTES // max(1, b * tile_hw * itemsize)))
    return tile_n, tile_hw


@functools.partial(jax.jit, static_argnames=("training", "temp", "epsilon"))
def concrete_gate_forward(x, loc, u, *, training=False, temp=2.0 / 3.0,
                          epsilon=0.1):
    """x: (N, n_heads, H, W); loc: (n_heads,); u: (n_heads,) uniform noise
    (only used when training=True). Returns (gated_x, penalty)."""
    N, B, H, W = x.shape
    HW = H * W
    gamma = -epsilon
    zeta = 1.0 + epsilon
    gamma_zeta_ratio = math.log(-gamma / zeta)

    # ---- gate / penalty math: (n_heads,)-sized, computed once in f32 -------
    loc_f32 = loc.astype(jnp.float32)
    if training:
        u_f32 = jnp.clip(u.astype(jnp.float32), 1e-6, 1.0 - 1e-6)
        pre = (jnp.log(u_f32) - jnp.log(1.0 - u_f32) + loc_f32) / temp
        penalty = jnp.sum(jax.nn.sigmoid(loc_f32 - temp * gamma_zeta_ratio)) / N
    else:
        pre = loc_f32
        penalty = jnp.float32(0.0)
    gates = jnp.clip(jax.nn.sigmoid(pre) * (zeta - gamma) + gamma, 0.0, 1.0)
    # cast once so the kernel multiplies in the native dtype (bf16 stays bf16)
    gates3 = gates.astype(x.dtype).reshape(1, B, 1)

    # ---- hot path: tiled, pipelined broadcast multiply in native layout ----
    x3 = x.reshape(N, B, HW)        # trailing-dim collapse: no data movement
    tile_n, tile_hw = _choose_tiles(N, B, HW, jnp.dtype(x.dtype).itemsize)
    grid = (pl.cdiv(N, tile_n), pl.cdiv(HW, tile_hw))

    out3 = pl.pallas_call(
        _gate_scale_kernel,
        out_shape=jax.ShapeDtypeStruct((N, B, HW), x.dtype),
        grid=grid,
        in_specs=[
            pl.BlockSpec((1, B, 1), lambda i, j: (0, 0, 0)),          # gates
            pl.BlockSpec((tile_n, B, tile_hw), lambda i, j: (i, 0, j)),  # x
        ],
        out_specs=pl.BlockSpec((tile_n, B, tile_hw), lambda i, j: (i, 0, j)),
        compiler_params=pltpu.CompilerParams(
            dimension_semantics=("parallel", "parallel"),
            vmem_limit_bytes=32 * 1024 * 1024,
        ),
    )(gates3, x3)

    return out3.reshape(N, B, H, W), penalty


# --------------------------------------------------------------------------- #
# Pure-JAX reference for validation
# --------------------------------------------------------------------------- #
def _reference(x, loc, u, *, training, temp=2.0 / 3.0, epsilon=0.1):
    gamma, zeta = -epsilon, 1.0 + epsilon
    gzr = math.log(-gamma / zeta)
    if training:
        s = jax.nn.sigmoid((jnp.log(u) - jnp.log(1.0 - u) + loc) / temp)
        pen = jnp.sum(jax.nn.sigmoid(loc - temp * gzr)) / x.shape[0]
    else:
        s = jax.nn.sigmoid(loc)
        pen = jnp.float32(0.0)
    gates = jnp.clip(s * (zeta - gamma) + gamma, 0.0, 1.0)
    return jnp.einsum('abcd,b->abcd', x, gates), pen


if __name__ == "__main__":
    key = jax.random.PRNGKey(0)
    k_x, k_loc, k_u, k_x2 = jax.random.split(key, 4)

    # --- primary shape from the module spec: (N, n_heads, H, W) -------------
    N, n_heads, H, W = 2, 4, 16, 16
    x = jax.random.normal(k_x, (N, n_heads, H, W), dtype=jnp.float32)
    # loc ~ Normal(0, 0.01), same init as the torch module
    loc = 0.01 * jax.random.normal(k_loc, (n_heads,), dtype=jnp.float32)
    u = jax.random.uniform(k_u, (n_heads,), dtype=jnp.float32,
                           minval=1e-6, maxval=1.0 - 1e-6)

    # eval-mode forward (deterministic path)
    out_eval, pen_eval = concrete_gate_forward(x, loc, u, training=False)
    jax.block_until_ready((out_eval, pen_eval))
    ref_out, ref_pen = _reference(x, loc, u, training=False)
    assert jnp.allclose(out_eval, ref_out, atol=1e-5, rtol=1e-5)
    assert jnp.allclose(pen_eval, ref_pen, atol=1e-6)

    # training-mode forward (noise u generated host-side for determinism)
    out_tr, pen_tr = concrete_gate_forward(x, loc, u, training=True)
    jax.block_until_ready((out_tr, pen_tr))
    ref_out_tr, ref_pen_tr = _reference(x, loc, u, training=True)
    assert jnp.allclose(out_tr, ref_out_tr, atol=1e-5, rtol=1e-5)
    assert jnp.allclose(pen_tr, ref_pen_tr, atol=1e-5, rtol=1e-5)

    # --- secondary shape exercising a multi-step grid (H*W > one tile) ------
    N2, B2, H2, W2 = 2, 8, 64, 64
    kb_x, kb_loc, kb_u = jax.random.split(k_x2, 3)
    xb = jax.random.normal(kb_x, (N2, B2, H2, W2), dtype=jnp.float32)
    locb = 0.01 * jax.random.normal(kb_loc, (B2,), dtype=jnp.float32)
    ub = jax.random.uniform(kb_u, (B2,), dtype=jnp.float32,
                            minval=1e-6, maxval=1.0 - 1e-6)
    out_b, pen_b = concrete_gate_forward(xb, locb, ub, training=True)
    jax.block_until_ready((out_b, pen_b))
    ref_out_b, ref_pen_b = _reference(xb, locb, ub, training=True)
    assert jnp.allclose(out_b, ref_out_b, atol=1e-5, rtol=1e-5)
    assert jnp.allclose(pen_b, ref_pen_b, atol=1e-5, rtol=1e-5)

    print("KERNEL_OK")
</pallas_src>

<mosaic_0001>
module attributes {stable_mosaic.version = 11 : i64} {
  func.func @_gate_scale_kernel(%arg0: i32, %arg1: i32, %arg2: memref<1x4x1xf32, #tpu.memory_space<vmem>>, %arg3: memref<2x4x256xf32, #tpu.memory_space<vmem>>, %arg4: memref<2x4x256xf32, #tpu.memory_space<vmem>>) attributes {dimension_semantics = [#tpu.dimension_semantics<parallel>, #tpu.dimension_semantics<parallel>], iteration_bounds = array<i64: 1, 1>, scalar_prefetch = 0 : i64, scratch_operands = 0 : i64, tpu.core_type = #tpu.core_type<tc>, window_params = [{pipeline_mode = #tpu.pipeline_mode<synchronous>, transform_indices = @transform_0, window_bounds = array<i64: 1, 4, 1>}, {transform_indices = @transform_1, window_bounds = array<i64: 2, 4, 256>}, {transform_indices = @transform_2, window_bounds = array<i64: 2, 4, 256>}]} {
    %c0 = arith.constant 0 : index
    %c0_0 = arith.constant 0 : index
    %c0_1 = arith.constant 0 : index
    %0 = vector.load %arg3[%c0, %c0_0, %c0_1] : memref<2x4x256xf32, #tpu.memory_space<vmem>>, vector<2x4x256xf32>
    %c0_2 = arith.constant 0 : index
    %c0_3 = arith.constant 0 : index
    %c0_4 = arith.constant 0 : index
    %1 = vector.load %arg2[%c0_2, %c0_3, %c0_4] : memref<1x4x1xf32, #tpu.memory_space<vmem>>, vector<1x4x1xf32>
    %2 = vector.broadcast %1 : vector<1x4x1xf32> to vector<2x4x256xf32>
    %3 = arith.mulf %0, %2 : vector<2x4x256xf32>
    %c0_5 = arith.constant 0 : index
    %c0_6 = arith.constant 0 : index
    %c0_7 = arith.constant 0 : index
    %4 = vector.load %arg4[%c0_5, %c0_6, %c0_7] : memref<2x4x256xf32, #tpu.memory_space<vmem>>, vector<2x4x256xf32>
    tpu.vector_store %arg4[%c0_5, %c0_6, %c0_7], %3 {strides = array<i32>} : memref<2x4x256xf32, #tpu.memory_space<vmem>>, vector<2x4x256xf32>,
    return
  }
  func.func @transform_0(%arg0: i32, %arg1: i32) -> (i32, i32, i32) {
    %c0_i32 = arith.constant 0 : i32
    %c0_i32_0 = arith.constant 0 : i32
    %c0_i32_1 = arith.constant 0 : i32
    %c0_i32_2 = arith.constant 0 : i32
    return %c0_i32, %c0_i32_0, %c0_i32_1 : i32, i32, i32
  }
  func.func @transform_1(%arg0: i32, %arg1: i32) -> (i32, i32, i32) {
    %c0_i32 = arith.constant 0 : i32
    %c0_i32_0 = arith.constant 0 : i32
    return %arg0, %c0_i32, %arg1 : i32, i32, i32
  }
  func.func @transform_2(%arg0: i32, %arg1: i32) -> (i32, i32, i32) {
    %c0_i32 = arith.constant 0 : i32
    %c0_i32_0 = arith.constant 0 : i32
    return %arg0, %c0_i32, %arg1 : i32, i32, i32
  }
}

</mosaic_0001>

<llo_original>
// kernel: concrete_gate_forward.1
$region0: #{concrete_gate_forward.1}
  #allocation0 [shape = 'u32[]', space=smem, size = 0x4, offset = 0x4, fixed_abs, tag = 'smem constant byte address 0x4 - core index']
  #allocation1 [shape = 'u32[144,128]{1,0:T(1,128)}', space=vmem, size = 0x12000, scoped, tag = 'internal scratch']
  %s0 = inlined_call_operand.vmem [shape: f32[1,4,1], index: 0, kind: input, shape index: {}]
  %s1 = inlined_call_operand.vmem [shape: f32[2,4,256], index: 1, kind: input, shape index: {}]
  %s2 = inlined_call_operand.vmem [shape: f32[2,4,256], index: 2, kind: output, shape index: {}]
  %s3 = sld [smem:[#allocation0]]
  $region18: #{concrete_gate_forward.1} parent=0
    _
  %s5 = ssub.s32 1, %s3
  %s6 = scalar_select 0, %s5, %s3
  // Predicated region
  $region2: #{concrete_gate_forward.1} parent=0 // pred_check
    _
  $region3: #{concrete_gate_forward.1} parent=0 // pred_check_branch
    %8 = sbr.rel (0) target = $region5
  $region4: #{concrete_gate_forward.1} parent=0 // pred_region
    _
  $region5: #{concrete_gate_forward.1} parent=0 // pred_fallthru
    _
  // Predicated region
  $region6: #{concrete_gate_forward.1} parent=0 // pred_check
    _
  $region7: #{concrete_gate_forward.1} parent=0 // pred_check_branch
    %10 = sbr.rel (0) target = $region9
  $region8: #{concrete_gate_forward.1} parent=0 // pred_region
    _
  $region9: #{concrete_gate_forward.1} parent=0 // pred_fallthru
    _
  %v11 = vld [vmem:[%s1] sm:$0xff]
  %v12 = vld [vmem:[%s1 + $0x8] sm:$0xff]
  %v13 = vld [vmem:[%s0] sm:$0xf]
  %15 = vset.pattern.permute.xlu0 0
  %16 = vperm.xlu0 %15, %v13
  %v17 = vpop.permute.xlu0 %16
  %v19 = vunpack.c.l.s4 839922192
  %v20 = vunpack.c.0.s8 %v19
  %v21 = vlaneseq
  %v22 = vshrl.u32 %v21, 7
  %v23 = vsub.s32 %v20, %v22
  %v24 = vrot.slane %v17, %v23
  %v26 = vmul.f32 %v11, %v24
  %v27 = vmul.f32 %v12, %v24
  %28 = vst [vmem:[%s2] sm:$0xff] %v26
  %29 = vst [vmem:[%s2 + $0x8] sm:$0xff] %v27
  // Predicated region
  $region10: #{concrete_gate_forward.1} parent=0 // pred_check
    _
  $region11: #{concrete_gate_forward.1} parent=0 // pred_check_branch
    %31 = sbr.rel (0) target = $region13
  $region12: #{concrete_gate_forward.1} parent=0 // pred_region
    _
  $region13: #{concrete_gate_forward.1} parent=0 // pred_fallthru
    _
  // Predicated region
  $region14: #{concrete_gate_forward.1} parent=0 // pred_check
    _
  $region15: #{concrete_gate_forward.1} parent=0 // pred_check_branch
    %33 = sbr.rel (0) target = $region17
  $region16: #{concrete_gate_forward.1} parent=0 // pred_region
    _
  $region17: #{concrete_gate_forward.1} parent=0 // pred_fallthru
    _

</llo_original>
